<compile_context>
chip_gen: v6e
topology: v6e:2x2x1
jax: 0.10.0
libtpu: 0.0.40
codegen_flags: <defaults>
</compile_context>

<pallas_src>
import functools

import jax
import jax.numpy as jnp
from jax import lax
from jax.experimental import pallas as pl
from jax.experimental.pallas import tpu as pltpu

BLOCK_SIZE = 3
DROP_PROB = 0.2


@functools.lru_cache(maxsize=1)
def _vmem_budgets():
    """(per-array block byte target, scoped vmem_limit_bytes) per generation."""
    vmem_bytes = None
    get_info = getattr(pltpu, "get_tpu_info", None)
    if get_info is not None:
        try:
            vmem_bytes = int(get_info().vmem_capacity_bytes)
        except Exception:  # non-TPU backend / interpret mode / older jax
            vmem_bytes = None
    if vmem_bytes is not None and vmem_bytes >= 100 * 2**20:
        # v5e / v6e (128 MiB physical VMEM): larger blocks amortize the
        # ~0.35 us per-grid-step overhead on this streaming op.
        return 4 * 2**20, 64 * 2**20
    # v7x (64 MiB physical VMEM) or unknown backend: conservative.
    # 3 arrays (x, noise, out) x 2 pipeline buffers x 2 MiB = 12 MiB + temps.
    return 2 * 2**20, 32 * 2**20


def _shift_flat(m, k, zero_fill):
    """`m` shifted by +k along the flattened H*W axis, zero-filled at the front."""
    axis = m.ndim - 1
    body = lax.slice_in_dim(m, 0, m.shape[axis] - k, axis=axis)
    return lax.concatenate([zero_fill, body], axis)


def _dropblock_kernel(x_ref, noise_ref, o_ref, *, block_size, drop_prob,
                      W, n_h, n_w):
    """One (tile_bc, H*W) block: seeds -> separable dilation -> scale/zero select."""
    x = x_ref[...]
    noise = noise_ref[...]
    mask_dtype = x.dtype if jnp.issubdtype(x.dtype, jnp.floating) else jnp.float32

    # A Bernoulli seed may only live where (row < n_h) and (col < n_w),
    # matching torch.rand(B, C, n_h, n_w).  row < n_h  <=>  flat < n_h * W.
    flat = lax.broadcasted_iota(jnp.int32, x.shape, x.ndim - 1)
    col = (flat & (W - 1)) if (W & (W - 1)) == 0 else (flat % W)
    valid = (col < n_w) & (flat < n_h * W)

    drop = (noise < jnp.asarray(drop_prob, noise.dtype)) & valid
    m = drop.astype(mask_dtype)

    # Separable block_size x block_size dilation on the flattened plane:
    # +1 steps cover the W direction, +W steps cover the H direction.  The
    # validity mask guarantees no set element sits in the last column / row
    # before any shift, so nothing spills across row boundaries.
    # TODO(synk): on real hardware use pltpu.roll (XLU slot) for the shifts;
    # slice+concat is kept here because it is layout- and interpret-safe.
    zero_w = jnp.zeros(x.shape[:-1] + (1,), mask_dtype)   # hoisted: no fresh
    zero_h = jnp.zeros(x.shape[:-1] + (W,), mask_dtype)   # broadcast per pass
    for _ in range(block_size - 1):
        m = jnp.maximum(m, _shift_flat(m, 1, zero_w))
    for _ in range(block_size - 1):
        m = jnp.maximum(m, _shift_flat(m, W, zero_h))

    scale = jnp.asarray(1.0 / (1.0 - drop_prob), x.dtype)
    o_ref[...] = jnp.where(m > 0, jnp.zeros_like(x), x * scale)


def _plan(x, block_size, tile_bc, target_block_bytes):
    B, C, H, W = x.shape
    bs = min(block_size, H, W)
    n_h, n_w = H - bs + 1, W - bs + 1
    bc = B * C
    L = H * W
    per_plane = L * x.dtype.itemsize
    if tile_bc is None:
        cap = max(1, target_block_bytes // per_plane)
        if bc <= cap:
            tile_bc = bc
            # v7x has 2 TensorCores: if everything fits one block, split in two
            # so dimension_semantics=("parallel",) has work for both cores.
            if bc >= 16 and bc % 2 == 0 and (bc // 2) % 8 == 0:
                tile_bc = bc // 2
        elif bc % 8 == 0 and cap >= 8:
            # Largest multiple of 8 that divides bc and fits the block target
            # (keeps the sublane dim 8-aligned; never decays to 1-plane tiles).
            t = (min(cap, bc) // 8) * 8
            while bc % t:
                t -= 8
            tile_bc = t
        else:
            # Awkward bc / very large planes: largest divisor of bc <= cap.
            # TODO(synk): halo-tiled H splitting for planes too big for VMEM.
            t = min(cap, bc)
            while bc % t:
                t -= 1
            tile_bc = t
    tile_bc = int(tile_bc)
    if bc % tile_bc:
        raise ValueError(f"tile_bc={tile_bc} must divide B*C={bc}")
    return bs, n_h, n_w, bc, L, tile_bc


def dropblock2d_pallas(x, *, key=None, noise=None, block_size=3, drop_prob=0.2,
                       training=True, tile_bc=None, donate_x=False):
    """DropBlock2D forward.

    Provide either `key` (fresh uniform noise is drawn like torch.rand) or
    `noise` (uniform(0,1), same shape as x; only noise[..., :n_h, :n_w] is
    consumed, the rest is masked in-kernel) when training with drop_prob > 0.
    """
    if (not training) or drop_prob <= 0.0:
        return x
    B, C, H, W = x.shape
    target_block_bytes, vmem_limit = _vmem_budgets()
    bs, n_h, n_w, bc, L, tile_bc = _plan(x, block_size, tile_bc, target_block_bytes)
    if bs == 1:
        # TODO(synk): F.dropout2d (per-channel dropout) fallback not implemented.
        raise NotImplementedError("block_size == 1 path not implemented")
    if noise is None:
        if key is None:
            raise ValueError("provide `key` or `noise` when training")
        noise_dtype = (x.dtype if jnp.issubdtype(x.dtype, jnp.floating)
                       else jnp.float32)
        noise = jax.random.uniform(key, x.shape, dtype=noise_dtype)
    if noise.shape != x.shape:
        raise ValueError("noise must have the same (B, C, H, W) shape as x")

    x2 = x.reshape(bc, L)          # contiguous NCHW -> free, lane-dense layout
    noise2 = noise.reshape(bc, L)

    kernel = functools.partial(_dropblock_kernel, block_size=bs,
                               drop_prob=float(drop_prob), W=W, n_h=n_h, n_w=n_w)
    out2 = pl.pallas_call(
        kernel,
        out_shape=jax.ShapeDtypeStruct((bc, L), x.dtype),
        grid=(bc // tile_bc,),
        in_specs=[pl.BlockSpec((tile_bc, L), lambda i: (i, 0)),
                  pl.BlockSpec((tile_bc, L), lambda i: (i, 0))],
        out_specs=pl.BlockSpec((tile_bc, L), lambda i: (i, 0)),
        compiler_params=pltpu.CompilerParams(
            dimension_semantics=("parallel",),     # planes are independent
            vmem_limit_bytes=vmem_limit),
        input_output_aliases=({0: 0} if donate_x else {}),
    )(x2, noise2)
    return out2.reshape(B, C, H, W)


def _reference(x, noise, block_size, drop_prob):
    """Pure-JAX reference of the intended DropBlock2D forward."""
    B, C, H, W = x.shape
    bs = min(block_size, H, W)
    n_h, n_w = H - bs + 1, W - bs + 1
    seed = (noise[:, :, :n_h, :n_w] < drop_prob).astype(jnp.float32)
    pad = bs - 1
    padded = jnp.pad(seed, ((0, 0), (0, 0), (pad, pad), (pad, pad)))
    block_mask = lax.reduce_window(
        padded, -jnp.inf, lax.max, (1, 1, bs, bs), (1, 1, 1, 1), "VALID")
    mask = (1.0 - block_mask) * (1.0 / (1.0 - drop_prob))
    return (x * mask).astype(x.dtype)


if __name__ == "__main__":
    root = jax.random.PRNGKey(0)
    kx1, kn1, kx2, kn2, kprod = jax.random.split(root, 5)

    # --- Case 1: nominal small shape (B, C, H, W) = (2, 4, 16, 16).
    B, C, H, W = 2, 4, 16, 16
    x1 = jax.random.normal(kx1, (B, C, H, W), dtype=jnp.float32)
    noise1 = jax.random.uniform(kn1, (B, C, H, W), dtype=jnp.float32)
    out1 = dropblock2d_pallas(x1, noise=noise1, block_size=BLOCK_SIZE,
                              drop_prob=DROP_PROB, training=True)
    out1 = jax.block_until_ready(out1)
    ref1 = _reference(x1, noise1, BLOCK_SIZE, DROP_PROB)
    assert out1.shape == x1.shape and out1.dtype == x1.dtype
    assert bool(jnp.allclose(out1, ref1, atol=1e-6)), float(
        jnp.max(jnp.abs(out1 - ref1)))

    # --- Case 2: larger B*C so the 1-D grid / pipeline has >= 2 steps.
    x2 = jax.random.normal(kx2, (4, 8, H, W), dtype=jnp.float32)
    noise2 = jax.random.uniform(kn2, (4, 8, H, W), dtype=jnp.float32)
    out2 = dropblock2d_pallas(x2, noise=noise2, block_size=BLOCK_SIZE,
                              drop_prob=DROP_PROB, training=True)
    out2 = jax.block_until_ready(out2)
    ref2 = _reference(x2, noise2, BLOCK_SIZE, DROP_PROB)
    assert bool(jnp.allclose(out2, ref2, atol=1e-6))

    # --- Case 3: key-driven path (wrapper draws fresh noise, like the module
    # calling torch.rand every forward) + eval-mode passthrough.
    out3 = dropblock2d_pallas(x1, key=kprod, block_size=BLOCK_SIZE,
                              drop_prob=DROP_PROB, training=True)
    out3 = jax.block_until_ready(out3)
    scale = 1.0 / (1.0 - DROP_PROB)
    kept_or_dropped = jnp.isclose(out3, x1 * scale, rtol=1e-5, atol=1e-6) | (out3 == 0.0)
    assert bool(jnp.all(kept_or_dropped))
    assert dropblock2d_pallas(x1, training=False) is x1

    print("KERNEL_OK")
</pallas_src>

<mosaic_0001>
module attributes {stable_mosaic.version = 11 : i64} {
  func.func @_dropblock_kernel(%arg0: i32, %arg1: memref<8x256xf32, #tpu.memory_space<vmem>>, %arg2: memref<8x256xf32, #tpu.memory_space<vmem>>, %arg3: memref<8x256xf32, #tpu.memory_space<vmem>>) attributes {dimension_semantics = [#tpu.dimension_semantics<parallel>], iteration_bounds = array<i64: 1>, scalar_prefetch = 0 : i64, scratch_operands = 0 : i64, tpu.core_type = #tpu.core_type<tc>, window_params = [{transform_indices = @transform_0, window_bounds = array<i64: 8, 256>}, {transform_indices = @transform_1, window_bounds = array<i64: 8, 256>}, {transform_indices = @transform_2, window_bounds = array<i64: 8, 256>}]} {
    %c0 = arith.constant 0 : index
    %c0_0 = arith.constant 0 : index
    %0 = vector.load %arg1[%c0, %c0_0] : memref<8x256xf32, #tpu.memory_space<vmem>>, vector<8x256xf32>
    %c0_1 = arith.constant 0 : index
    %c0_2 = arith.constant 0 : index
    %1 = vector.load %arg2[%c0_1, %c0_2] : memref<8x256xf32, #tpu.memory_space<vmem>>, vector<8x256xf32>
    %2 = tpu.iota {dimensions = array<i32: 1>} : vector<8x256xi32>
    %c15_i32 = arith.constant 15 : i32
    %3 = vector.broadcast %c15_i32 : i32 to vector<8x256xi32>
    %4 = arith.andi %2, %3 : vector<8x256xi32>
    %c14_i32 = arith.constant 14 : i32
    %5 = vector.broadcast %c14_i32 : i32 to vector<8x256xi32>
    %6 = arith.cmpi slt, %4, %5 : vector<8x256xi32>
    %c224_i32 = arith.constant 224 : i32
    %7 = vector.broadcast %c224_i32 : i32 to vector<8x256xi32>
    %8 = arith.cmpi slt, %2, %7 : vector<8x256xi32>
    %9 = arith.andi %6, %8 : vector<8x256xi1>
    %cst = arith.constant 2.000000e-01 : f32
    %10 = vector.broadcast %cst : f32 to vector<8x256xf32>
    %11 = arith.cmpf olt, %1, %10 : vector<8x256xf32>
    %12 = arith.andi %11, %9 : vector<8x256xi1>
    %13 = arith.extui %12 : vector<8x256xi1> to vector<8x256xi32>
    %14 = arith.sitofp %13 : vector<8x256xi32> to vector<8x256xf32>
    %cst_3 = arith.constant 0.000000e+00 : f32
    %15 = vector.broadcast %cst_3 : f32 to vector<8x1xf32>
    %cst_4 = arith.constant 0.000000e+00 : f32
    %16 = vector.broadcast %cst_4 : f32 to vector<8x16xf32>
    %17 = vector.extract_strided_slice %14 {offsets = [0, 0], sizes = [8, 255], strides = [1, 1]} : vector<8x256xf32> to vector<8x255xf32>
    %18 = tpu.concatenate %15, %17 in 1 : vector<8x1xf32>, vector<8x255xf32> -> vector<8x256xf32>
    %19 = arith.maximumf %14, %18 : vector<8x256xf32>
    %20 = vector.extract_strided_slice %19 {offsets = [0, 0], sizes = [8, 255], strides = [1, 1]} : vector<8x256xf32> to vector<8x255xf32>
    %21 = tpu.concatenate %15, %20 in 1 : vector<8x1xf32>, vector<8x255xf32> -> vector<8x256xf32>
    %22 = arith.maximumf %19, %21 : vector<8x256xf32>
    %23 = vector.extract_strided_slice %22 {offsets = [0, 0], sizes = [8, 240], strides = [1, 1]} : vector<8x256xf32> to vector<8x240xf32>
    %24 = tpu.concatenate %16, %23 in 1 : vector<8x16xf32>, vector<8x240xf32> -> vector<8x256xf32>
    %25 = arith.maximumf %22, %24 : vector<8x256xf32>
    %26 = vector.extract_strided_slice %25 {offsets = [0, 0], sizes = [8, 240], strides = [1, 1]} : vector<8x256xf32> to vector<8x240xf32>
    %27 = tpu.concatenate %16, %26 in 1 : vector<8x16xf32>, vector<8x240xf32> -> vector<8x256xf32>
    %28 = arith.maximumf %25, %27 : vector<8x256xf32>
    %cst_5 = arith.constant 0.000000e+00 : f32
    %29 = vector.broadcast %cst_5 : f32 to vector<8x256xf32>
    %30 = arith.cmpf ogt, %28, %29 : vector<8x256xf32>
    %cst_6 = arith.constant 0.000000e+00 : f32
    %31 = vector.broadcast %cst_6 : f32 to vector<8x256xf32>
    %cst_7 = arith.constant 1.250000e+00 : f32
    %32 = vector.broadcast %cst_7 : f32 to vector<8x256xf32>
    %33 = arith.mulf %0, %32 : vector<8x256xf32>
    %34 = arith.select %30, %31, %33 : vector<8x256xi1>, vector<8x256xf32>
    %c0_8 = arith.constant 0 : index
    %c0_9 = arith.constant 0 : index
    %35 = vector.load %arg3[%c0_8, %c0_9] : memref<8x256xf32, #tpu.memory_space<vmem>>, vector<8x256xf32>
    tpu.vector_store %arg3[%c0_8, %c0_9], %34 {strides = array<i32>} : memref<8x256xf32, #tpu.memory_space<vmem>>, vector<8x256xf32>,
    return
  }
  func.func @transform_0(%arg0: i32) -> (i32, i32) {
    %c0_i32 = arith.constant 0 : i32
    %c0_i32_0 = arith.constant 0 : i32
    return %arg0, %c0_i32 : i32, i32
  }
  func.func @transform_1(%arg0: i32) -> (i32, i32) {
    %c0_i32 = arith.constant 0 : i32
    %c0_i32_0 = arith.constant 0 : i32
    return %arg0, %c0_i32 : i32, i32
  }
  func.func @transform_2(%arg0: i32) -> (i32, i32) {
    %c0_i32 = arith.constant 0 : i32
    %c0_i32_0 = arith.constant 0 : i32
    return %arg0, %c0_i32 : i32, i32
  }
}

</mosaic_0001>

<llo_original>
// kernel: tpu_custom_call.1
$region0: #{tpu_custom_call.1}
  #allocation0 [shape = 'u32[]', space=smem, size = 0x4, offset = 0x4, fixed_abs, tag = 'smem constant byte address 0x4 - core index']
  #allocation1 [shape = 'u32[144,128]{1,0:T(1,128)}', space=vmem, size = 0x12000, scoped, tag = 'internal scratch']
  %s0 = inlined_call_operand.hbm [shape: f32[8,256], index: 0, kind: input, shape index: {}]
  %s1 = inlined_call_operand.hbm [shape: f32[8,256], index: 1, kind: input, shape index: {}]
  %s2 = inlined_call_operand.hbm [shape: f32[8,256], index: 2, kind: output, shape index: {}]
  %s3 = sld [smem:[#allocation0]]
  $region26: #{tpu_custom_call.1} parent=0
    _
  %s5 = ssub.s32 1, %s3
  %s6 = scalar_select 0, %s5, %s3
  $region1: #{tpu_custom_call.1} parent=0
    #allocation2 [shape = 'u8[8192]{0}', space=vmem, size = 0x2000, scoped, tag = 'input window, operand 0, single buffered']
    #allocation3 [shape = 's32[1]{0}', space=sflag, size = 0x4, scoped, tag = 'scoped memory for tpu_custom_call.1']
    #allocation4 [shape = 's32[1]{0}', space=sflag, size = 0x4, scoped, tag = 'scoped memory for tpu_custom_call.1']
    #allocation5 [shape = 'u8[8192]{0}', space=vmem, size = 0x2000, scoped, tag = 'input window, operand 1, single buffered']
    #allocation6 [shape = 's32[1]{0}', space=sflag, size = 0x4, scoped, tag = 'scoped memory for tpu_custom_call.1']
    #allocation7 [shape = 'u8[8192]{0}', space=vmem, size = 0x2000, scoped, tag = 'output window, operand 0, single buffered']
    %7 = vsyncpa [#allocation3], 0
    %8 = vsyncpa [#allocation6], 0
    %9 = vsyncpa [#allocation4], 0
    // Predicated region
    $region2: #{tpu_custom_call.1} parent=1 // pred_check
      _
    $region3: #{tpu_custom_call.1} parent=1 // pred_check_branch
      %11 = sbr.rel (0) target = $region5
    $region4: #{tpu_custom_call.1} parent=1 // pred_region
      %s13 = ssub.s32 256, 256
      %14 = vsyncadd [#allocation3], %s13
      %s16 = sshll.u32 [#allocation2], 4
      %s17 = int_to_ptr.vmem [resolvable:$true] %s16
      %19 = dma.hbm_to_vmem [thread:$0]  %s0, 256, %s17, [#allocation3]
    $region5: #{tpu_custom_call.1} parent=1 // pred_fallthru
      _
    // Predicated region
    $region6: #{tpu_custom_call.1} parent=1 // pred_check
      _
    $region7: #{tpu_custom_call.1} parent=1 // pred_check_branch
      %21 = sbr.rel (0) target = $region9
    $region8: #{tpu_custom_call.1} parent=1 // pred_region
      %s23 = ssub.s32 256, 256
      %24 = vsyncadd [#allocation6], %s23
      %s26 = sshll.u32 [#allocation5], 4
      %s27 = int_to_ptr.vmem [resolvable:$true] %s26
      %29 = dma.hbm_to_vmem [thread:$0]  %s1, 256, %s27, [#allocation6]
    $region9: #{tpu_custom_call.1} parent=1 // pred_fallthru
      _
    // Predicated region
    $region10: #{tpu_custom_call.1} parent=1 // pred_check
      _
    $region11: #{tpu_custom_call.1} parent=1 // pred_check_branch
      %31 = sbr.rel (0) target = $region13
    $region12: #{tpu_custom_call.1} parent=1 // pred_region
      %32 = dma.done [#allocation3], 256
    $region13: #{tpu_custom_call.1} parent=1 // pred_fallthru
      _
    // Predicated region
    $region14: #{tpu_custom_call.1} parent=1 // pred_check
      _
    $region15: #{tpu_custom_call.1} parent=1 // pred_check_branch
      %34 = sbr.rel (0) target = $region17
    $region16: #{tpu_custom_call.1} parent=1 // pred_region
      %35 = dma.done [#allocation6], 256
    $region17: #{tpu_custom_call.1} parent=1 // pred_fallthru
      _
    %v36 = vld [vmem:[#allocation2] sm:$0xff]
    %v37 = vld [vmem:[#allocation2 + $0x8] sm:$0xff]
    %v38 = vld [vmem:[#allocation5] sm:$0xff]
    %v39 = vld [vmem:[#allocation5 + $0x8] sm:$0xff]
    %v40 = vlaneseq
    %v41 = vand.u32 %v40, 127
    %v42 = vadd.s32 %v41, 128
    %v43 = vand.u32 %v41, 15
    %v44 = vand.u32 %v42, 15
    %vm45 = vcmp.lt.s32.totalorder %v43, 14
    %vm46 = vcmp.lt.s32.totalorder %v44, 14
    %vm47 = vcmp.lt.s32.totalorder %v41, 224
    %vm48 = vcmp.lt.s32.totalorder %v42, 224
    %vm49 = vmand %vm45, %vm47
    %vm50 = vmand %vm46, %vm48
    %vm51 = vcmp.lt.f32.partialorder %v38, 0.2
    %vm52 = vcmp.lt.f32.partialorder %v39, 0.2
    %vm53 = vmand %vm51, %vm49
    %vm54 = vmand %vm52, %vm50
    %v55 = vsel %vm53, 1, 0
    %v56 = vsel %vm54, 1, 0
    %v57 = vcvt.s32.f32 %v55
    %v58 = vcvt.s32.f32 %v56
    %61 = vrot.lane.b32.xlu0 %v57, 1
    %v62 = vpop.permute.xlu0 %61
    %63 = vrot.lane.b32.xlu0 %v58, 1
    %v64 = vpop.permute.xlu0 %63
    %vm65 = vcmask 7168
    %v66 = vsel %vm65, %v62, %v64
    %v69 = vsel %vm65, 0.0, %v62
    %v70 = vmax.f32 %v57, %v69
    %v71 = vmax.f32 %v58, %v66
    %74 = vrot.lane.b32.xlu0 %v70, 1
    %v75 = vpop.permute.xlu0 %74
    %76 = vrot.lane.b32.xlu0 %v71, 1
    %v77 = vpop.permute.xlu0 %76
    %v78 = vsel %vm65, %v75, %v77
    %v81 = vsel %vm65, 0.0, %v75
    %v82 = vmax.f32 %v70, %v81
    %v83 = vmax.f32 %v71, %v78
    %86 = vrot.lane.b32.xlu0 %v82, 16
    %v87 = vpop.permute.xlu0 %86
    %88 = vrot.lane.b32.xlu0 %v83, 16
    %v89 = vpop.permute.xlu0 %88
    %vm90 = vcmask 130048
    %v91 = vsel %vm90, %v87, %v89
    %v94 = vsel %vm90, 0.0, %v87
    %v95 = vmax.f32 %v82, %v94
    %v96 = vmax.f32 %v83, %v91
    %99 = vrot.lane.b32.xlu0 %v95, 16
    %v100 = vpop.permute.xlu0 %99
    %101 = vrot.lane.b32.xlu0 %v96, 16
    %v102 = vpop.permute.xlu0 %101
    %v103 = vsel %vm90, %v100, %v102
    %v106 = vsel %vm90, 0.0, %v100
    %v107 = vmax.f32 %v95, %v106
    %v108 = vmax.f32 %v96, %v103
    %vm109 = vcmp.gt.f32.partialorder %v107, 0.0
    %vm110 = vcmp.gt.f32.partialorder %v108, 0.0
    %v111 = vmul.f32 %v36, 1.25
    %v112 = vmul.f32 %v37, 1.25
    %v113 = vsel %vm109, 0.0, %v111
    %v114 = vsel %vm110, 0.0, %v112
    %115 = vst [vmem:[#allocation7] sm:$0xff] %v113
    %116 = vst [vmem:[#allocation7 + $0x8] sm:$0xff] %v114
    // Predicated region
    $region18: #{tpu_custom_call.1} parent=1 // pred_check
      _
    $region19: #{tpu_custom_call.1} parent=1 // pred_check_branch
      %118 = sbr.rel (0) target = $region21
    $region20: #{tpu_custom_call.1} parent=1 // pred_region
      %s120 = ssub.s32 256, 256
      %121 = vsyncadd [#allocation4], %s120
      %s123 = sshll.u32 [#allocation7], 4
      %s124 = int_to_ptr.vmem [resolvable:$true] %s123
      %126 = dma.vmem_to_hbm [thread:$0]  %s124, 256, %s2, [#allocation4]
    $region21: #{tpu_custom_call.1} parent=1 // pred_fallthru
      _
    // Predicated region
    $region22: #{tpu_custom_call.1} parent=1 // pred_check
      _
    $region23: #{tpu_custom_call.1} parent=1 // pred_check_branch
      %128 = sbr.rel (0) target = $region25
    $region24: #{tpu_custom_call.1} parent=1 // pred_region
      %129 = dma.done [#allocation4], 256
    $region25: #{tpu_custom_call.1} parent=1 // pred_fallthru
      _
    %130 = vsyncpa [#allocation3], 1
    %131 = vsyncpa [#allocation6], 1
    %132 = vsyncpa [#allocation4], 1

</llo_original>
